<compile_context>
chip_gen: v5e
topology: v5e:2x2
jax: 0.10.0
libtpu: 0.0.40
codegen_flags: <defaults>
</compile_context>

<pallas_src>
import functools

import jax
import jax.numpy as jnp
from jax.experimental import pallas as pl
from jax.experimental.pallas import tpu as pltpu


def _layer_norm(t, g, eps=1e-5):
    # torch LayerNorm(feats): mean / var(unbiased=False) in f32, eps=1e-5, gain g.
    t = t.astype(jnp.float32)
    mean = jnp.mean(t, axis=-1, keepdims=True)
    var = jnp.mean((t - mean) ** 2, axis=-1, keepdims=True)
    return (t - mean) * jax.lax.rsqrt(var + eps) * g


def cross_attention_kernel(x_ref, ctx_ref, wq_ref, wkv_ref, nullk_ref, nullv_ref,
                           wout_ref, g_in_ref, g_out_ref, o_ref, *, heads, dim_head):
    inner = heads * dim_head
    scale = dim_head ** -0.5

    x = x_ref[0]        # (N, D)   in input dtype
    ctx = ctx_ref[0]    # (M, Dc)

    # self.norm (LayerNorm on queries); norm_context is Identity (default args).
    # Stats in f32; result cast back to the input dtype so bf16 deployments feed
    # bf16 operands to the MXU (accumulation stays f32 below).
    xn = _layer_norm(x, g_in_ref[...]).astype(x.dtype)

    # Fused projections: one (N,D)@(D,inner) and one (M,Dc)@(Dc,2*inner) MXU op.
    q = jnp.dot(xn, wq_ref[...], preferred_element_type=jnp.float32)       # (N, inner)
    q = q * scale                                                          # scale applied once
    kv = jnp.dot(ctx, wkv_ref[...], preferred_element_type=jnp.float32)    # (M, 2*inner)
    k = kv[:, :inner]   # split at `inner` (multiple of 128 -> lane-aligned)
    v = kv[:, inner:]

    # Fold the learned null token in as one extra K/V row so its logit comes out
    # of the same QK^T matmul (append instead of prepend: softmax + weighted sum
    # over keys are permutation-invariant, so the result is identical).
    k = jnp.concatenate([k, nullk_ref[...].astype(jnp.float32)], axis=0)   # (M+1, inner)
    v = jnp.concatenate([v, nullv_ref[...].astype(jnp.float32)], axis=0)   # (M+1, inner)

    # Head-major (heads, rows, dim_head) views built once; all attention math is
    # then batched over heads (no per-head matmuls, no explicit transposes).
    def split_heads(t):
        return jnp.stack(
            [t[:, h * dim_head:(h + 1) * dim_head] for h in range(heads)], axis=0)

    q3 = split_heads(q)   # (H, N,   dh)
    k3 = split_heads(k)   # (H, M+1, dh)
    v3 = split_heads(v)   # (H, M+1, dh)

    # TODO(synk): optional boolean `mask` argument not implemented (forward is
    # exercised with mask=None); it would mask the logits `s` before max/exp.
    # TODO(synk): cosine_sim_attn=False path only (module default).

    # Logits + single-pass softmax over the M+1 key axis (f32 throughout,
    # matching torch's softmax(dtype=float32)).
    s = jnp.einsum('hnd,hmd->hnm', q3, k3,
                   preferred_element_type=jnp.float32)                     # (H, N, M+1)
    m = jnp.max(s, axis=-1, keepdims=True)
    p = jnp.exp(s - m)
    denom = jnp.sum(p, axis=-1, keepdims=True)
    inv = pl.reciprocal(denom, approx=True)        # EUP slot
    inv = inv * (2.0 - denom * inv)                # one Newton step -> ~f32 accurate
    p = p * inv

    o3 = jnp.einsum('hnm,hmd->hnd', p, v3,
                    preferred_element_type=jnp.float32)                    # (H, N, dh)

    # Output projection: Wout is passed head-major (H, dh, D); the head-batched
    # matmul summed over heads equals concat_h(o) @ Wout without lane-offset
    # concatenations of the attention output.
    out_h = jnp.einsum('hnd,hde->hne', o3, wout_ref[...],
                       preferred_element_type=jnp.float32)                 # (H, N, D)
    out = out_h[0]
    for h in range(1, heads):                      # unrolled VPU adds (H is tiny)
        out = out + out_h[h]

    out = _layer_norm(out, g_out_ref[...])         # LayerNorm inside to_out Sequential
    o_ref[0] = out.astype(o_ref.dtype)

    # TODO(synk): for production shapes (N in the thousands, dim >= 512) add a
    # query-tile grid axis (accumulator + pl.when) so the working set fits v7x's
    # 64 MiB VMEM; at these demo shapes whole-sequence residency is optimal.


def cross_attention(x, context, params, *, heads, dim_head):
    b, n, dim = x.shape
    _, m, cdim = context.shape
    inner = heads * dim_head

    # Head-major output-projection weight: (inner, dim) -> (heads, dim_head, dim).
    wout3 = params["wout"].reshape(heads, dim_head, dim)

    def full_spec(shape):
        nd = len(shape)
        return pl.BlockSpec(shape, lambda i, _nd=nd: (0,) * _nd)

    grid_spec = pltpu.PrefetchScalarGridSpec(
        num_scalar_prefetch=0,
        grid=(b,),
        in_specs=[
            pl.BlockSpec((1, n, dim), lambda i: (i, 0, 0)),     # x
            pl.BlockSpec((1, m, cdim), lambda i: (i, 0, 0)),    # context
            full_spec((dim, inner)),                            # Wq^T
            full_spec((cdim, 2 * inner)),                       # Wkv^T
            full_spec((1, inner)),                              # null k (tiled per head)
            full_spec((1, inner)),                              # null v (tiled per head)
            full_spec((heads, dim_head, dim)),                  # Wout^T, head-major
            full_spec((1, dim)),                                # g of input LayerNorm
            full_spec((1, dim)),                                # g of output LayerNorm
        ],
        out_specs=pl.BlockSpec((1, n, dim), lambda i: (i, 0, 0)),
    )

    kernel = functools.partial(cross_attention_kernel, heads=heads, dim_head=dim_head)
    return pl.pallas_call(
        kernel,
        out_shape=jax.ShapeDtypeStruct((b, n, dim), x.dtype),
        grid_spec=grid_spec,
        # Batch elements are independent -> parallel axis (megacore sharding).
        compiler_params=pltpu.CompilerParams(dimension_semantics=("parallel",)),
    )(x, context, params["wq"], params["wkv"], params["null_k"], params["null_v"],
      wout3, params["g_in"], params["g_out"])


def init_params(key, dim, context_dim, heads, dim_head):
    inner = heads * dim_head
    k0, k1, k2, k3 = jax.random.split(key, 4)
    wq = 0.02 * jax.random.normal(k0, (dim, inner), jnp.float32)
    wkv = 0.02 * jax.random.normal(k1, (context_dim, 2 * inner), jnp.float32)
    wout = 0.02 * jax.random.normal(k2, (inner, dim), jnp.float32)
    null_kv = jax.random.normal(k3, (2, dim_head), jnp.float32)   # nn.Parameter(randn(2, d))
    # In torch the same (dim_head,) null k / v is broadcast to every head -> tile.
    null_k = jnp.tile(null_kv[0], heads)[None, :]                 # (1, inner)
    null_v = jnp.tile(null_kv[1], heads)[None, :]                 # (1, inner)
    g_in = jnp.ones((1, dim), jnp.float32)
    g_out = jnp.ones((1, dim), jnp.float32)
    return dict(wq=wq, wkv=wkv, wout=wout, null_k=null_k, null_v=null_v,
                g_in=g_in, g_out=g_out)


def cross_attention_ref(x, context, params, *, heads, dim_head):
    """Pure-JAX reference mirroring the torch module semantics (mask=None)."""
    b, n, dim = x.shape
    inner = heads * dim_head
    scale = dim_head ** -0.5

    def ln(t, g):
        mean = jnp.mean(t, -1, keepdims=True)
        var = jnp.mean((t - mean) ** 2, -1, keepdims=True)
        return (t - mean) * jax.lax.rsqrt(var + 1e-5) * g

    xn = ln(x, params["g_in"][0])
    q = xn @ params["wq"]
    kv = context @ params["wkv"]
    k, v = kv[..., :inner], kv[..., inner:]

    def split_heads(t):
        return t.reshape(t.shape[0], t.shape[1], heads, dim_head).transpose(0, 2, 1, 3)

    q, k, v = map(split_heads, (q, k, v))                                   # (b, h, s, d)
    nk = jnp.broadcast_to(params["null_k"].reshape(1, heads, 1, dim_head), (b, heads, 1, dim_head))
    nv = jnp.broadcast_to(params["null_v"].reshape(1, heads, 1, dim_head), (b, heads, 1, dim_head))
    k = jnp.concatenate([nk, k], axis=2)
    v = jnp.concatenate([nv, v], axis=2)
    q = q * scale
    sim = jnp.einsum('bhid,bhjd->bhij', q, k)
    attn = jax.nn.softmax(sim.astype(jnp.float32), axis=-1).astype(sim.dtype)
    out = jnp.einsum('bhij,bhjd->bhid', attn, v)
    out = out.transpose(0, 2, 1, 3).reshape(b, n, inner)
    out = out @ params["wout"]
    return ln(out, params["g_out"][0])


if __name__ == "__main__":
    B, N, M = 2, 16, 8
    DIM, CDIM = 64, 64
    HEADS, DIM_HEAD = 2, 64

    key = jax.random.PRNGKey(0)
    kx, kc, kp = jax.random.split(key, 3)
    x = jax.random.normal(kx, (B, N, DIM), jnp.float32)
    context = jax.random.normal(kc, (B, M, CDIM), jnp.float32)
    params = init_params(kp, DIM, CDIM, HEADS, DIM_HEAD)

    out = cross_attention(x, context, params, heads=HEADS, dim_head=DIM_HEAD)
    out = jax.block_until_ready(out)

    ref = cross_attention_ref(x, context, params, heads=HEADS, dim_head=DIM_HEAD)
    assert out.shape == (B, N, DIM)
    assert jnp.allclose(out, ref, atol=2e-4, rtol=2e-4), \
        f"max abs diff = {float(jnp.max(jnp.abs(out - ref)))}"
    print("KERNEL_OK")
</pallas_src>

<mosaic_0001>
module attributes {stable_mosaic.version = 11 : i64} {
  func.func @cross_attention_kernel(%arg0: i32, %arg1: memref<1x16x64xf32, #tpu.memory_space<vmem>>, %arg2: memref<1x8x64xf32, #tpu.memory_space<vmem>>, %arg3: memref<64x128xf32, #tpu.memory_space<vmem>>, %arg4: memref<64x256xf32, #tpu.memory_space<vmem>>, %arg5: memref<1x128xf32, #tpu.memory_space<vmem>>, %arg6: memref<1x128xf32, #tpu.memory_space<vmem>>, %arg7: memref<2x64x64xf32, #tpu.memory_space<vmem>>, %arg8: memref<1x64xf32, #tpu.memory_space<vmem>>, %arg9: memref<1x64xf32, #tpu.memory_space<vmem>>, %arg10: memref<1x16x64xf32, #tpu.memory_space<vmem>>) attributes {dimension_semantics = [#tpu.dimension_semantics<parallel>], iteration_bounds = array<i64: 2>, scalar_prefetch = 0 : i64, scratch_operands = 0 : i64, tpu.core_type = #tpu.core_type<tc>, window_params = [{transform_indices = @transform_0, window_bounds = array<i64: 1, 16, 64>}, {transform_indices = @transform_1, window_bounds = array<i64: 1, 8, 64>}, {pipeline_mode = #tpu.pipeline_mode<synchronous>, transform_indices = @transform_2, window_bounds = array<i64: 64, 128>}, {pipeline_mode = #tpu.pipeline_mode<synchronous>, transform_indices = @transform_3, window_bounds = array<i64: 64, 256>}, {pipeline_mode = #tpu.pipeline_mode<synchronous>, transform_indices = @transform_4, window_bounds = array<i64: 1, 128>}, {pipeline_mode = #tpu.pipeline_mode<synchronous>, transform_indices = @transform_5, window_bounds = array<i64: 1, 128>}, {pipeline_mode = #tpu.pipeline_mode<synchronous>, transform_indices = @transform_6, window_bounds = array<i64: 2, 64, 64>}, {pipeline_mode = #tpu.pipeline_mode<synchronous>, transform_indices = @transform_7, window_bounds = array<i64: 1, 64>}, {pipeline_mode = #tpu.pipeline_mode<synchronous>, transform_indices = @transform_8, window_bounds = array<i64: 1, 64>}, {transform_indices = @transform_9, window_bounds = array<i64: 1, 16, 64>}]} {
    %c0 = arith.constant 0 : index
    %c0_0 = arith.constant 0 : index
    %c0_1 = arith.constant 0 : index
    %0 = vector.load %arg1[%c0, %c0_0, %c0_1] : memref<1x16x64xf32, #tpu.memory_space<vmem>>, vector<1x16x64xf32>
    %1 = vector.shape_cast %0 : vector<1x16x64xf32> to vector<16x64xf32>
    %c0_2 = arith.constant 0 : index
    %c0_3 = arith.constant 0 : index
    %c0_4 = arith.constant 0 : index
    %2 = vector.load %arg2[%c0_2, %c0_3, %c0_4] : memref<1x8x64xf32, #tpu.memory_space<vmem>>, vector<1x8x64xf32>
    %3 = vector.shape_cast %2 : vector<1x8x64xf32> to vector<8x64xf32>
    %c0_5 = arith.constant 0 : index
    %c0_6 = arith.constant 0 : index
    %4 = vector.load %arg8[%c0_5, %c0_6] : memref<1x64xf32, #tpu.memory_space<vmem>>, vector<1x64xf32>
    %cst = arith.constant dense<0.000000e+00> : vector<16xf32>
    %5 = vector.multi_reduction <add>, %1, %cst [1] : vector<16x64xf32> to vector<16xf32>
    %6 = vector.shape_cast %5 : vector<16xf32> to vector<16x1xf32>
    %cst_7 = arith.constant 6.400000e+01 : f32
    %7 = vector.broadcast %cst_7 : f32 to vector<16x1xf32>
    %8 = arith.divf %6, %7 : vector<16x1xf32>
    %9 = vector.broadcast %8 : vector<16x1xf32> to vector<16x64xf32>
    %10 = arith.subf %1, %9 : vector<16x64xf32>
    %11 = arith.mulf %10, %10 : vector<16x64xf32>
    %cst_8 = arith.constant dense<0.000000e+00> : vector<16xf32>
    %12 = vector.multi_reduction <add>, %11, %cst_8 [1] : vector<16x64xf32> to vector<16xf32>
    %13 = vector.shape_cast %12 : vector<16xf32> to vector<16x1xf32>
    %cst_9 = arith.constant 6.400000e+01 : f32
    %14 = vector.broadcast %cst_9 : f32 to vector<16x1xf32>
    %15 = arith.divf %13, %14 : vector<16x1xf32>
    %16 = vector.broadcast %8 : vector<16x1xf32> to vector<16x64xf32>
    %17 = arith.subf %1, %16 : vector<16x64xf32>
    %cst_10 = arith.constant 9.99999974E-6 : f32
    %18 = vector.broadcast %cst_10 : f32 to vector<16x1xf32>
    %19 = arith.addf %15, %18 : vector<16x1xf32>
    %20 = math.rsqrt %19 : vector<16x1xf32>
    %21 = vector.broadcast %20 : vector<16x1xf32> to vector<16x64xf32>
    %22 = arith.mulf %17, %21 : vector<16x64xf32>
    %23 = vector.broadcast %4 : vector<1x64xf32> to vector<16x64xf32>
    %24 = arith.mulf %22, %23 : vector<16x64xf32>
    %c0_11 = arith.constant 0 : index
    %c0_12 = arith.constant 0 : index
    %25 = vector.load %arg3[%c0_11, %c0_12] : memref<64x128xf32, #tpu.memory_space<vmem>>, vector<64x128xf32>
    %cst_13 = arith.constant dense<0.000000e+00> : vector<16x128xf32>
    %26 = tpu.matmul %24, %25, %cst_13 {dimension_numbers = #tpu.dot_dimension_numbers<[1], [0], [0], [1], [0, 0, 1, 1], [], []>} : vector<16x64xf32>, vector<64x128xf32>, vector<16x128xf32> -> vector<16x128xf32>
    %cst_14 = arith.constant 1.250000e-01 : f32
    %27 = vector.broadcast %cst_14 : f32 to vector<16x128xf32>
    %28 = arith.mulf %26, %27 : vector<16x128xf32>
    %c0_15 = arith.constant 0 : index
    %c0_16 = arith.constant 0 : index
    %29 = vector.load %arg4[%c0_15, %c0_16] : memref<64x256xf32, #tpu.memory_space<vmem>>, vector<64x256xf32>
    %cst_17 = arith.constant dense<0.000000e+00> : vector<8x256xf32>
    %30 = tpu.matmul %3, %29, %cst_17 {dimension_numbers = #tpu.dot_dimension_numbers<[1], [0], [0], [1], [0, 0, 1, 1], [], []>} : vector<8x64xf32>, vector<64x256xf32>, vector<8x256xf32> -> vector<8x256xf32>
    %31 = vector.extract_strided_slice %30 {offsets = [0, 0], sizes = [8, 128], strides = [1, 1]} : vector<8x256xf32> to vector<8x128xf32>
    %32 = vector.extract_strided_slice %30 {offsets = [0, 128], sizes = [8, 128], strides = [1, 1]} : vector<8x256xf32> to vector<8x128xf32>
    %c0_18 = arith.constant 0 : index
    %c0_19 = arith.constant 0 : index
    %33 = vector.load %arg5[%c0_18, %c0_19] : memref<1x128xf32, #tpu.memory_space<vmem>>, vector<1x128xf32>
    %34 = tpu.concatenate %31, %33 in 0 : vector<8x128xf32>, vector<1x128xf32> -> vector<9x128xf32>
    %c0_20 = arith.constant 0 : index
    %c0_21 = arith.constant 0 : index
    %35 = vector.load %arg6[%c0_20, %c0_21] : memref<1x128xf32, #tpu.memory_space<vmem>>, vector<1x128xf32>
    %36 = tpu.concatenate %32, %35 in 0 : vector<8x128xf32>, vector<1x128xf32> -> vector<9x128xf32>
    %37 = vector.extract_strided_slice %28 {offsets = [0, 0], sizes = [16, 64], strides = [1, 1]} : vector<16x128xf32> to vector<16x64xf32>
    %38 = vector.extract_strided_slice %28 {offsets = [0, 64], sizes = [16, 64], strides = [1, 1]} : vector<16x128xf32> to vector<16x64xf32>
    %39 = vector.shape_cast %37 : vector<16x64xf32> to vector<1x16x64xf32>
    %40 = vector.shape_cast %38 : vector<16x64xf32> to vector<1x16x64xf32>
    %41 = tpu.concatenate %39, %40 in 0 : vector<1x16x64xf32>, vector<1x16x64xf32> -> vector<2x16x64xf32>
    %42 = vector.extract_strided_slice %34 {offsets = [0, 0], sizes = [9, 64], strides = [1, 1]} : vector<9x128xf32> to vector<9x64xf32>
    %43 = vector.extract_strided_slice %34 {offsets = [0, 64], sizes = [9, 64], strides = [1, 1]} : vector<9x128xf32> to vector<9x64xf32>
    %44 = vector.shape_cast %42 : vector<9x64xf32> to vector<1x9x64xf32>
    %45 = vector.shape_cast %43 : vector<9x64xf32> to vector<1x9x64xf32>
    %46 = tpu.concatenate %44, %45 in 0 : vector<1x9x64xf32>, vector<1x9x64xf32> -> vector<2x9x64xf32>
    %47 = vector.extract_strided_slice %36 {offsets = [0, 0], sizes = [9, 64], strides = [1, 1]} : vector<9x128xf32> to vector<9x64xf32>
    %48 = vector.extract_strided_slice %36 {offsets = [0, 64], sizes = [9, 64], strides = [1, 1]} : vector<9x128xf32> to vector<9x64xf32>
    %49 = vector.shape_cast %47 : vector<9x64xf32> to vector<1x9x64xf32>
    %50 = vector.shape_cast %48 : vector<9x64xf32> to vector<1x9x64xf32>
    %51 = tpu.concatenate %49, %50 in 0 : vector<1x9x64xf32>, vector<1x9x64xf32> -> vector<2x9x64xf32>
    "tpu.trace_start"() <{level = 10 : i32, message = "hnd,hmd->hnm"}> : () -> ()
    %cst_22 = arith.constant dense<0.000000e+00> : vector<2x16x9xf32>
    %52 = tpu.matmul %41, %46, %cst_22 {dimension_numbers = #tpu.dot_dimension_numbers<[2], [2], [1], [1], [0, 0, 0, 1, 1, 1], [0], [0]>} : vector<2x16x64xf32>, vector<2x9x64xf32>, vector<2x16x9xf32> -> vector<2x16x9xf32>
    "tpu.trace_stop"() : () -> ()
    %cst_23 = arith.constant dense<0xFF800000> : vector<2x16xf32>
    %53 = vector.multi_reduction <maximumf>, %52, %cst_23 [2] : vector<2x16x9xf32> to vector<2x16xf32>
    %54 = vector.shape_cast %53 : vector<2x16xf32> to vector<2x16x1xf32>
    %55 = vector.broadcast %54 : vector<2x16x1xf32> to vector<2x16x9xf32>
    %56 = arith.subf %52, %55 : vector<2x16x9xf32>
    %57 = math.exp %56 : vector<2x16x9xf32>
    %cst_24 = arith.constant dense<0.000000e+00> : vector<2x16xf32>
    %58 = vector.multi_reduction <add>, %57, %cst_24 [2] : vector<2x16x9xf32> to vector<2x16xf32>
    %59 = vector.shape_cast %58 : vector<2x16xf32> to vector<2x16x1xf32>
    %60 = tpu.reciprocal %59 {approx = true} : vector<2x16x1xf32> -> vector<2x16x1xf32>
    %61 = arith.mulf %59, %60 : vector<2x16x1xf32>
    %cst_25 = arith.constant 2.000000e+00 : f32
    %62 = vector.broadcast %cst_25 : f32 to vector<2x16x1xf32>
    %63 = arith.subf %62, %61 : vector<2x16x1xf32>
    %64 = arith.mulf %60, %63 : vector<2x16x1xf32>
    %65 = vector.broadcast %64 : vector<2x16x1xf32> to vector<2x16x9xf32>
    %66 = arith.mulf %57, %65 : vector<2x16x9xf32>
    "tpu.trace_start"() <{level = 10 : i32, message = "hnm,hmd->hnd"}> : () -> ()
    %cst_26 = arith.constant dense<0.000000e+00> : vector<2x16x64xf32>
    %67 = tpu.matmul %66, %51, %cst_26 {dimension_numbers = #tpu.dot_dimension_numbers<[2], [1], [1], [2], [0, 0, 0, 1, 1, 2], [0], [0]>} : vector<2x16x9xf32>, vector<2x9x64xf32>, vector<2x16x64xf32> -> vector<2x16x64xf32>
    "tpu.trace_stop"() : () -> ()
    %c0_27 = arith.constant 0 : index
    %c0_28 = arith.constant 0 : index
    %c0_29 = arith.constant 0 : index
    %68 = vector.load %arg7[%c0_27, %c0_28, %c0_29] : memref<2x64x64xf32, #tpu.memory_space<vmem>>, vector<2x64x64xf32>
    "tpu.trace_start"() <{level = 10 : i32, message = "hnd,hde->hne"}> : () -> ()
    %cst_30 = arith.constant dense<0.000000e+00> : vector<2x16x64xf32>
    %69 = tpu.matmul %67, %68, %cst_30 {dimension_numbers = #tpu.dot_dimension_numbers<[2], [1], [1], [2], [0, 0, 0, 1, 1, 2], [0], [0]>} : vector<2x16x64xf32>, vector<2x64x64xf32>, vector<2x16x64xf32> -> vector<2x16x64xf32>
    "tpu.trace_stop"() : () -> ()
    %70 = vector.extract_strided_slice %69 {offsets = [0, 0, 0], sizes = [1, 16, 64], strides = [1, 1, 1]} : vector<2x16x64xf32> to vector<1x16x64xf32>
    %71 = vector.shape_cast %70 : vector<1x16x64xf32> to vector<16x64xf32>
    %72 = vector.extract_strided_slice %69 {offsets = [1, 0, 0], sizes = [1, 16, 64], strides = [1, 1, 1]} : vector<2x16x64xf32> to vector<1x16x64xf32>
    %73 = vector.shape_cast %72 : vector<1x16x64xf32> to vector<16x64xf32>
    %74 = arith.addf %71, %73 : vector<16x64xf32>
    %c0_31 = arith.constant 0 : index
    %c0_32 = arith.constant 0 : index
    %75 = vector.load %arg9[%c0_31, %c0_32] : memref<1x64xf32, #tpu.memory_space<vmem>>, vector<1x64xf32>
    %cst_33 = arith.constant dense<0.000000e+00> : vector<16xf32>
    %76 = vector.multi_reduction <add>, %74, %cst_33 [1] : vector<16x64xf32> to vector<16xf32>
    %77 = vector.shape_cast %76 : vector<16xf32> to vector<16x1xf32>
    %cst_34 = arith.constant 6.400000e+01 : f32
    %78 = vector.broadcast %cst_34 : f32 to vector<16x1xf32>
    %79 = arith.divf %77, %78 : vector<16x1xf32>
    %80 = vector.broadcast %79 : vector<16x1xf32> to vector<16x64xf32>
    %81 = arith.subf %74, %80 : vector<16x64xf32>
    %82 = arith.mulf %81, %81 : vector<16x64xf32>
    %cst_35 = arith.constant dense<0.000000e+00> : vector<16xf32>
    %83 = vector.multi_reduction <add>, %82, %cst_35 [1] : vector<16x64xf32> to vector<16xf32>
    %84 = vector.shape_cast %83 : vector<16xf32> to vector<16x1xf32>
    %cst_36 = arith.constant 6.400000e+01 : f32
    %85 = vector.broadcast %cst_36 : f32 to vector<16x1xf32>
    %86 = arith.divf %84, %85 : vector<16x1xf32>
    %87 = vector.broadcast %79 : vector<16x1xf32> to vector<16x64xf32>
    %88 = arith.subf %74, %87 : vector<16x64xf32>
    %cst_37 = arith.constant 9.99999974E-6 : f32
    %89 = vector.broadcast %cst_37 : f32 to vector<16x1xf32>
    %90 = arith.addf %86, %89 : vector<16x1xf32>
    %91 = math.rsqrt %90 : vector<16x1xf32>
    %92 = vector.broadcast %91 : vector<16x1xf32> to vector<16x64xf32>
    %93 = arith.mulf %88, %92 : vector<16x64xf32>
    %94 = vector.broadcast %75 : vector<1x64xf32> to vector<16x64xf32>
    %95 = arith.mulf %93, %94 : vector<16x64xf32>
    %c0_38 = arith.constant 0 : index
    %c0_39 = arith.constant 0 : index
    %c0_40 = arith.constant 0 : index
    %96 = vector.load %arg10[%c0_38, %c0_39, %c0_40] : memref<1x16x64xf32, #tpu.memory_space<vmem>>, vector<1x16x64xf32>
    %97 = vector.shape_cast %96 : vector<1x16x64xf32> to vector<16x64xf32>
    %98 = vector.shape_cast %95 : vector<16x64xf32> to vector<1x16x64xf32>
    tpu.vector_store %arg10[%c0_38, %c0_39, %c0_40], %98 {strides = array<i32>} : memref<1x16x64xf32, #tpu.memory_space<vmem>>, vector<1x16x64xf32>,
    return
  }
  func.func @transform_0(%arg0: i32) -> (i32, i32, i32) {
    %c0_i32 = arith.constant 0 : i32
    %c0_i32_0 = arith.constant 0 : i32
    %c0_i32_1 = arith.constant 0 : i32
    return %arg0, %c0_i32, %c0_i32_0 : i32, i32, i32
  }
  func.func @transform_1(%arg0: i32) -> (i32, i32, i32) {
    %c0_i32 = arith.constant 0 : i32
    %c0_i32_0 = arith.constant 0 : i32
    %c0_i32_1 = arith.constant 0 : i32
    return %arg0, %c0_i32, %c0_i32_0 : i32, i32, i32
  }
  func.func @transform_2(%arg0: i32) -> (i32, i32) {
    %c0_i32 = arith.constant 0 : i32
    %c0_i32_0 = arith.constant 0 : i32
    %c0_i32_1 = arith.constant 0 : i32
    return %c0_i32, %c0_i32_0 : i32, i32
  }
  func.func @transform_3(%arg0: i32) -> (i32, i32) {
    %c0_i32 = arith.constant 0 : i32
    %c0_i32_0 = arith.constant 0 : i32
    %c0_i32_1 = arith.constant 0 : i32
    return %c0_i32, %c0_i32_0 : i32, i32
  }
  func.func @transform_4(%arg0: i32) -> (i32, i32) {
    %c0_i32 = arith.constant 0 : i32
    %c0_i32_0 = arith.constant 0 : i32
    %c0_i32_1 = arith.constant 0 : i32
    return %c0_i32, %c0_i32_0 : i32, i32
  }
  func.func @transform_5(%arg0: i32) -> (i32, i32) {
    %c0_i32 = arith.constant 0 : i32
    %c0_i32_0 = arith.constant 0 : i32
    %c0_i32_1 = arith.constant 0 : i32
    return %c0_i32, %c0_i32_0 : i32, i32
  }
  func.func @transform_6(%arg0: i32) -> (i32, i32, i32) {
    %c0_i32 = arith.constant 0 : i32
    %c0_i32_0 = arith.constant 0 : i32
    %c0_i32_1 = arith.constant 0 : i32
    %c0_i32_2 = arith.constant 0 : i32
    return %c0_i32, %c0_i32_0, %c0_i32_1 : i32, i32, i32
  }
  func.func @transform_7(%arg0: i32) -> (i32, i32) {
    %c0_i32 = arith.constant 0 : i32
    %c0_i32_0 = arith.constant 0 : i32
    %c0_i32_1 = arith.constant 0 : i32
    return %c0_i32, %c0_i32_0 : i32, i32
  }
  func.func @transform_8(%arg0: i32) -> (i32, i32) {
    %c0_i32 = arith.constant 0 : i32
    %c0_i32_0 = arith.constant 0 : i32
    %c0_i32_1 = arith.constant 0 : i32
    return %c0_i32, %c0_i32_0 : i32, i32
  }
  func.func @transform_9(%arg0: i32) -> (i32, i32, i32) {
    %c0_i32 = arith.constant 0 : i32
    %c0_i32_0 = arith.constant 0 : i32
    %c0_i32_1 = arith.constant 0 : i32
    return %arg0, %c0_i32, %c0_i32_0 : i32, i32, i32
  }
}

</mosaic_0001>

<llo_original>
// kernel: tpu_custom_call.1
$region0: #{tpu_custom_call.1}
  #allocation0 [shape = 'u32[]', space=smem, size = 0x4, offset = 0x4, fixed_abs, tag = 'smem constant byte address 0x4 - core index']
  #allocation1 [shape = 'u32[72,128]{1,0:T(1,128)}', space=vmem, size = 0x9000, scoped, tag = 'internal scratch']
  %s0 = inlined_call_operand.hbm [shape: f32[2,16,64], index: 0, kind: input, shape index: {}]
  %s1 = inlined_call_operand.hbm [shape: f32[2,8,64], index: 1, kind: input, shape index: {}]
  %s2 = inlined_call_operand.hbm [shape: f32[64,128], index: 2, kind: input, shape index: {}]
  %s3 = inlined_call_operand.hbm [shape: f32[64,256], index: 3, kind: input, shape index: {}]
  %s4 = inlined_call_operand.vmem [shape: f32[1,128], index: 4, kind: input, shape index: {}]
  %s5 = inlined_call_operand.vmem [shape: f32[1,128], index: 5, kind: input, shape index: {}]
  %s6 = inlined_call_operand.hbm [shape: f32[2,64,64], index: 6, kind: input, shape index: {}]
  %s7 = inlined_call_operand.vmem [shape: f32[1,64], index: 7, kind: input, shape index: {}]
  %s8 = inlined_call_operand.vmem [shape: f32[1,64], index: 8, kind: input, shape index: {}]
  %s9 = inlined_call_operand.hbm [shape: f32[2,16,64], index: 9, kind: output, shape index: {}]
  %s10 = sld [smem:[#allocation0]]
  $region89: #{tpu_custom_call.1} parent=0
    _
  %s12 = ssub.s32 1, %s10
  %s13 = scalar_select 0, %s12, %s10
  $region1: #{tpu_custom_call.1} parent=0
    #allocation2 [shape = 'u8[16384]{0}', space=vmem, size = 0x4000, scoped, tag = 'input window, operand 0']
    #allocation3 [shape = 's32[2]{0}', space=sflag, size = 0x8, scoped, tag = 'scoped memory for tpu_custom_call.1']
    #allocation4 [shape = 's32[2]{0}', space=sflag, size = 0x8, scoped, tag = 'scoped memory for tpu_custom_call.1']
    #allocation5 [shape = 'u8[8192]{0}', space=vmem, size = 0x2000, scoped, tag = 'input window, operand 1']
    #allocation6 [shape = 's32[2]{0}', space=sflag, size = 0x8, scoped, tag = 'scoped memory for tpu_custom_call.1']
    #allocation7 [shape = 'u8[32768]{0}', space=vmem, size = 0x8000, scoped, tag = 'input window, operand 2, single buffered']
    #allocation8 [shape = 'u8[65536]{0}', space=vmem, size = 0x10000, scoped, tag = 'input window, operand 3, single buffered']
    #allocation9 [shape = 's32[1]{0}', space=sflag, size = 0x4, scoped, tag = 'scoped memory for tpu_custom_call.1']
    #allocation10 [shape = 'u8[65536]{0}', space=vmem, size = 0x10000, scoped, tag = 'input window, operand 6, single buffered']
    #allocation11 [shape = 'u8[16384]{0}', space=vmem, size = 0x4000, scoped, tag = 'output window, operand 0']
    %14 = vsyncpa [#allocation3], 0
    %s15 = scalar_lea.sflag [#allocation3], 1
    %16 = vsyncpa %s15, 0
    %17 = vsyncpa [#allocation6], 0
    %s18 = scalar_lea.sflag [#allocation6], 1
    %19 = vsyncpa %s18, 0
    %20 = vsyncpa [#allocation9], 0
    %21 = vsyncpa [#allocation4], 0
    %s22 = scalar_lea.sflag [#allocation4], 1
    %23 = vsyncpa %s22, 0
    loop: start=0, step=1, limit=4
    $region2: #{tpu_custom_call.1} parent=1 // loop_pre_header
      _
    $region3: #{tpu_custom_call.1} parent=1 // loop_header
      %s25 = sphi 0, %s29
      %p26 = scmp.ge.s32.totalorder %s25, 4
      %s35 = sphi 0, %s37
      %s38 = sphi 0, %s35
      %s39 = sphi 0, %s38
      %s55 = sphi 0, %s39
      %s61 = sphi 0, %s63
      %s64 = sphi 0, %s61
      %s65 = sphi 0, %s64
      %s81 = sphi 0, %s65
      %s85 = sphi 0, %s85
      %s87 = sphi 0, %s85
      %s88 = sphi 0, %s87
      %s102 = sphi 0, %s88
      %s106 = sphi 0, %s106
      %s108 = sphi 0, %s106
      %s109 = sphi 0, %s108
      %s123 = sphi 0, %s109
      %s127 = sphi 0, %s127
      %s129 = sphi 0, %s127
      %s130 = sphi 0, %s129
      %s144 = sphi 0, %s130
      %s148 = sphi 0, %s148
      %s150 = sphi 0, %s148
      %s151 = sphi 0, %s150
      %s165 = sphi 0, %s151
      %s169 = sphi 0, %s169
      %s171 = sphi 0, %s169
      %s172 = sphi 0, %s171
      %s186 = sphi 0, %s172
      %s190 = sphi 0, %s190
      %s192 = sphi 0, %s190
      %s193 = sphi 0, %s192
      %s207 = sphi 0, %s193
      %s211 = sphi 0, %s211
      %s213 = sphi 0, %s211
      %s214 = sphi 0, %s213
      %s228 = sphi 0, %s214
      %s234 = sphi 0, %s236
      %s237 = sphi 0, %s234
      %s238 = sphi 0, %s237
      %s254 = sphi 0, %s238
    $region4: #{tpu_custom_call.1} parent=1 // loop_header_branch
      %28 = sbr.rel (%p26) target = $region8
    $region5: #{tpu_custom_call.1} parent=1 // loop_body
      %s30 = ssub.s32 %s25, 1
      %s31 = ssub.s32 %s25, 2
      %s32 = sadd.s32 %s25, 1
      %s33 = ssub.s32 %s25, %s32
      %p34 = scmp.eq.s32.totalorder %s33, 0
      %s36 = sadd.s32 %s35, 1
      %s37 = scalar_select %p34, %s35, %s36
      %p40 = pneg %p34
      %p41 = scmp.eq.s32.totalorder %s25, 1
      %p42 = por %p40, %p41
      %p43 = scmp.ne.s32.totalorder %s35, %s38
      %p44 = scmp.eq.s32.totalorder %s25, 0
      %p45 = por %p43, %p44
      %p46 = scmp.ne.s32.totalorder %s35, %s38
      %p47 = scmp.eq.s32.totalorder %s30, 1
      %p48 = por %p46, %p47
      %p49 = scmp.ne.s32.totalorder %s38, %s39
      %p50 = scmp.eq.s32.totalorder %s30, 0
      %p51 = por %p49, %p50
      %p52 = scmp.ne.s32.totalorder %s38, %s39
      %p53 = scmp.eq.s32.totalorder %s31, 1
      %p54 = por %p52, %p53
      %p56 = scmp.ne.s32.totalorder %s39, %s55
      %p57 = scmp.eq.s32.totalorder %s31, 0
      %p58 = por %p56, %p57
      %s59 = ssub.s32 %s25, %s32
      %p60 = scmp.eq.s32.totalorder %s59, 0
      %s62 = sadd.s32 %s61, 1
      %s63 = scalar_select %p60, %s61, %s62
      %p66 = pneg %p60
      %p67 = scmp.eq.s32.totalorder %s25, 1
      %p68 = por %p66, %p67
      %p69 = scmp.ne.s32.totalorder %s61, %s64
      %p70 = scmp.eq.s32.totalorder %s25, 0
      %p71 = por %p69, %p70
      %p72 = scmp.ne.s32.totalorder %s61, %s64
      %p73 = scmp.eq.s32.totalorder %s30, 1
      %p74 = por %p72, %p73
      %p75 = scmp.ne.s32.totalorder %s64, %s65
      %p76 = scmp.eq.s32.totalorder %s30, 0
      %p77 = por %p75, %p76
      %p78 = scmp.ne.s32.totalorder %s64, %s65
      %p79 = scmp.eq.s32.totalorder %s31, 1
      %p80 = por %p78, %p79
      %p82 = scmp.ne.s32.totalorder %s65, %s81
      %p83 = scmp.eq.s32.totalorder %s31, 0
      %p84 = por %p82, %p83
      %s86 = sadd.s32 %s85, 1
      %p89 = scmp.eq.s32.totalorder %s25, 1
      %p90 = scmp.ne.s32.totalorder %s85, %s87
      %p91 = scmp.eq.s32.totalorder %s25, 0
      %p92 = por %p90, %p91
      %p93 = scmp.ne.s32.totalorder %s85, %s87
      %p94 = scmp.eq.s32.totalorder %s30, 1
      %p95 = por %p93, %p94
      %p96 = scmp.ne.s32.totalorder %s87, %s88
      %p97 = scmp.eq.s32.totalorder %s30, 0
      %p98 = por %p96, %p97
      %p99 = scmp.ne.s32.totalorder %s87, %s88
      %p100 = scmp.eq.s32.totalorder %s31, 1
      %p101 = por %p99, %p100
      %p103 = scmp.ne.s32.totalorder %s88, %s102
      %p104 = scmp.eq.s32.totalorder %s31, 0
      %p105 = por %p103, %p104
      %s107 = sadd.s32 %s106, 1
      %p110 = scmp.eq.s32.totalorder %s25, 1
      %p111 = scmp.ne.s32.totalorder %s106, %s108
      %p112 = scmp.eq.s32.totalorder %s25, 0
      %p113 = por %p111, %p112
      %p114 = scmp.ne.s32.totalorder %s106, %s108
      %p115 = scmp.eq.s32.totalorder %s30, 1
      %p116 = por %p114, %p115
      %p117 = scmp.ne.s32.totalorder %s108, %s109
      %p118 = scmp.eq.s32.totalorder %s30, 0
      %p119 = por %p117, %p118
      %p120 = scmp.ne.s32.totalorder %s108, %s109
      %p121 = scmp.eq.s32.totalorder %s31, 1
      %p122 = por %p120, %p121
      %p124 = scmp.ne.s32.totalorder %s109, %s123
      %p125 = scmp.eq.s32.totalorder %s31, 0
      %p126 = por %p124, %p125
      %s128 = sadd.s32 %s127, 1
      %p131 = scmp.eq.s32.totalorder %s25, 1
      %p132 = scmp.ne.s32.totalorder %s127, %s129
      %p133 = scmp.eq.s32.totalorder %s25, 0
      %p134 = por %p132, %p133
      %p135 = scmp.ne.s32.totalorder %s127, %s129
      %p136 = scmp.eq.s32.totalorder %s30, 1
      %p137 = por %p135, %p136
      %p138 = scmp.ne.s32.totalorder %s129, %s130
      %p139 = scmp.eq.s32.totalorder %s30, 0
      %p140 = por %p138, %p139
      %p141 = scmp.ne.s32.totalorder %s129, %s130
      %p142 = scmp.eq.s32.totalorder %s31, 1
      %p143 = por %p141, %p142
      %p145 = scmp.ne.s32.totalorder %s130, %s144
      %p146 = scmp.eq.s32.totalorder %s31, 0
      %p147 = por %p145, %p146
      %s149 = sadd.s32 %s148, 1
      %p152 = scmp.eq.s32.totalorder %s25, 1
      %p153 = scmp.ne.s32.totalorder %s148, %s150
      %p154 = scmp.eq.s32.totalorder %s25, 0
      %p155 = por %p153, %p154
      %p156 = scmp.ne.s32.totalorder %s148, %s150
      %p157 = scmp.eq.s32.totalorder %s30, 1
      %p158 = por %p156, %p157
      %p159 = scmp.ne.s32.totalorder %s150, %s151
      %p160 = scmp.eq.s32.totalorder %s30, 0
      %p161 = por %p159, %p160
      %p162 = scmp.ne.s32.totalorder %s150, %s151
      %p163 = scmp.eq.s32.totalorder %s31, 1
      %p164 = por %p162, %p163
      %p166 = scmp.ne.s32.totalorder %s151, %s165
      %p167 = scmp.eq.s32.totalorder %s31, 0
      %p168 = por %p166, %p167
      %s170 = sadd.s32 %s169, 1
      %p173 = scmp.eq.s32.totalorder %s25, 1
      %p174 = scmp.ne.s32.totalorder %s169, %s171
      %p175 = scmp.eq.s32.totalorder %s25, 0
      %p176 = por %p174, %p175
      %p177 = scmp.ne.s32.totalorder %s169, %s171
      %p178 = scmp.eq.s32.totalorder %s30, 1
      %p179 = por %p177, %p178
      %p180 = scmp.ne.s32.totalorder %s171, %s172
      %p181 = scmp.eq.s32.totalorder %s30, 0
      %p182 = por %p180, %p181
      %p183 = scmp.ne.s32.totalorder %s171, %s172
      %p184 = scmp.eq.s32.totalorder %s31, 1
      %p185 = por %p183, %p184
      %p187 = scmp.ne.s32.totalorder %s172, %s186
      %p188 = scmp.eq.s32.totalorder %s31, 0
      %p189 = por %p187, %p188
      %s191 = sadd.s32 %s190, 1
      %p194 = scmp.eq.s32.totalorder %s25, 1
      %p195 = scmp.ne.s32.totalorder %s190, %s192
      %p196 = scmp.eq.s32.totalorder %s25, 0
      %p197 = por %p195, %p196
      %p198 = scmp.ne.s32.totalorder %s190, %s192
      %p199 = scmp.eq.s32.totalorder %s30, 1
      %p200 = por %p198, %p199
      %p201 = scmp.ne.s32.totalorder %s192, %s193
      %p202 = scmp.eq.s32.totalorder %s30, 0
      %p203 = por %p201, %p202
      %p204 = scmp.ne.s32.totalorder %s192, %s193
      %p205 = scmp.eq.s32.totalorder %s31, 1
      %p206 = por %p204, %p205
      %p208 = scmp.ne.s32.totalorder %s193, %s207
      %p209 = scmp.eq.s32.totalorder %s31, 0
      %p210 = por %p208, %p209
      %s212 = sadd.s32 %s211, 1
      %p215 = scmp.eq.s32.totalorder %s25, 1
      %p216 = scmp.ne.s32.totalorder %s211, %s213
      %p217 = scmp.eq.s32.totalorder %s25, 0
      %p218 = por %p216, %p217
      %p219 = scmp.ne.s32.totalorder %s211, %s213
      %p220 = scmp.eq.s32.totalorder %s30, 1
      %p221 = por %p219, %p220
      %p222 = scmp.ne.s32.totalorder %s213, %s214
      %p223 = scmp.eq.s32.totalorder %s30, 0
      %p224 = por %p222, %p223
      %p225 = scmp.ne.s32.totalorder %s213, %s214
      %p226 = scmp.eq.s32.totalorder %s31, 1
      %p227 = por %p225, %p226
      %p229 = scmp.ne.s32.totalorder %s214, %s228
      %p230 = scmp.eq.s32.totalorder %s31, 0
      %p231 = por %p229, %p230
      %s232 = ssub.s32 %s25, %s32
      %p233 = scmp.eq.s32.totalorder %s232, 0
      %s235 = sadd.s32 %s234, 1
      %s236 = scalar_select %p233, %s234, %s235
      %p239 = pneg %p233
      %p240 = scmp.eq.s32.totalorder %s25, 1
      %p241 = por %p239, %p240
      %p242 = scmp.ne.s32.totalorder %s234, %s237
      %p243 = scmp.eq.s32.totalorder %s25, 0
      %p244 = por %p242, %p243
      %p245 = scmp.ne.s32.totalorder %s234, %s237
      %p246 = scmp.eq.s32.totalorder %s30, 1
      %p247 = por %p245, %p246
      %p248 = scmp.ne.s32.totalorder %s237, %s238
      %p249 = scmp.eq.s32.totalorder %s30, 0
      %p250 = por %p248, %p249
      %p251 = scmp.ne.s32.totalorder %s237, %s238
      %p252 = scmp.eq.s32.totalorder %s31, 1
      %p253 = por %p251, %p252
      %p255 = scmp.ne.s32.totalorder %s238, %s254
      %p256 = scmp.eq.s32.totalorder %s31, 0
      %p257 = por %p255, %p256
      %p258 = scmp.le.s32.totalorder 1, %s25
      %p259 = scmp.lt.s32.totalorder %s25, 3
      %p260 = pnand %p258, %p259
      %p261 = pneg %p260
      // Predicated region
      $region9: #{tpu_custom_call.1} parent=5 // pred_check
        _
      $region10: #{tpu_custom_call.1} parent=5 // pred_check_branch
        %263 = sbr.rel (%p260) target = $region12
      $region11: #{tpu_custom_call.1} parent=5 // pred_region
        %s264 = ssub.s32 %s25, 1
        // Predicated region
        $region13: #{tpu_custom_call.1} parent=11 // pred_check
          %p265 = pneg %p98
        $region14: #{tpu_custom_call.1} parent=11 // pred_check_branch
          %267 = sbr.rel (%p265) target = $region16
        $region15: #{tpu_custom_call.1} parent=11 // pred_region
          %269 = vsyncadd [#allocation6], 0
          %s270 = sshll.u32 %s2, 4
          %s271 = int_to_ptr.hbm [resolvable:$true] %s270
          %s272 = sshll.u32 [#allocation7], 4
          %s273 = int_to_ptr.vmem [resolvable:$true] %s272
          %278 = dma.hbm_to_vmem [thread:$0]  %s271, 1024, %s273, [#allocation6], 128, 128, 8
        $region16: #{tpu_custom_call.1} parent=11 // pred_fallthru
          _
        // Predicated region
        $region17: #{tpu_custom_call.1} parent=11 // pred_check
          %p279 = pneg %p119
        $region18: #{tpu_custom_call.1} parent=11 // pred_check_branch
          %281 = sbr.rel (%p279) target = $region20
        $region19: #{tpu_custom_call.1} parent=11 // pred_region
          %283 = vsyncadd [#allocation9], 0
          %s284 = sshll.u32 %s3, 4
          %s285 = int_to_ptr.hbm [resolvable:$true] %s284
          %s286 = sshll.u32 [#allocation8], 4
          %s287 = int_to_ptr.vmem [resolvable:$true] %s286
          %292 = dma.hbm_to_vmem [thread:$0]  %s285, 2048, %s287, [#allocation9], 256, 256, 16
        $region20: #{tpu_custom_call.1} parent=11 // pred_fallthru
          _
        // Predicated region
        $region21: #{tpu_custom_call.1} parent=11 // pred_check
          %p293 = pneg %p140
        $region22: #{tpu_custom_call.1} parent=11 // pred_check_branch
          %295 = sbr.rel (%p293) target = $region24
        $region23: #{tpu_custom_call.1} parent=11 // pred_region
          _
        $region24: #{tpu_custom_call.1} parent=11 // pred_fallthru
          _
        // Predicated region
        $region25: #{tpu_custom_call.1} parent=11 // pred_check
          %p296 = pneg %p161
        $region26: #{tpu_custom_call.1} parent=11 // pred_check_branch
          %298 = sbr.rel (%p296) target = $region28
        $region27: #{tpu_custom_call.1} parent=11 // pred_region
          _
        $region28: #{tpu_custom_call.1} parent=11 // pred_fallthru
          _
        // Predicated region
        $region29: #{tpu_custom_call.1} parent=11 // pred_check
          %p299 = pneg %p182
        $region30: #{tpu_custom_call.1} parent=11 // pred_check_branch
          %301 = sbr.rel (%p299) target = $region32
        $region31: #{tpu_custom_call.1} parent=11 // pred_region
          %303 = vsyncadd [#allocation9], 0
          %s304 = sshll.u32 %s6, 4
          %s305 = int_to_ptr.hbm [resolvable:$true] %s304
          %s306 = sshll.u32 [#allocation10], 4
          %s307 = int_to_ptr.vmem [resolvable:$true] %s306
          %312 = dma.hbm_to_vmem [thread:$0]  %s305, 2048, %s307, [#allocation9], 128, 128, 8
        $region32: #{tpu_custom_call.1} parent=11 // pred_fallthru
          _
        // Predicated region
        $region33: #{tpu_custom_call.1} parent=11 // pred_check
          %p313 = pneg %p203
        $region34: #{tpu_custom_call.1} parent=11 // pred_check_branch
          %315 = sbr.rel (%p313) target = $region36
        $region35: #{tpu_custom_call.1} parent=11 // pred_region
          _
        $region36: #{tpu_custom_call.1} parent=11 // pred_fallthru
          _
        // Predicated region
        $region37: #{tpu_custom_call.1} parent=11 // pred_check
          %p316 = pneg %p224
        $region38: #{tpu_custom_call.1} parent=11 // pred_check_branch
          %318 = sbr.rel (%p316) target = $region40
        $region39: #{tpu_custom_call.1} parent=11 // pred_region
          _
        $region40: #{tpu_custom_call.1} parent=11 // pred_fallthru
          _
      $region12: #{tpu_custom_call.1} parent=5 // pred_fallthru
        _
      %p319 = scmp.lt.s32.totalorder %s25, 2
      // Predicated region
      $region41: #{tpu_custom_call.1} parent=5 // pred_check
        %p320 = pneg %p319
      $region42: #{tpu_custom_call.1} parent=5 // pred_check_branch
        %322 = sbr.rel (%p320) target = $region44
      $region43: #{tpu_custom_call.1} parent=5 // pred_region
        // Predicated region
        $region45: #{tpu_custom_call.1} parent=43 // pred_check
          %p323 = pneg %p45
        $region46: #{tpu_custom_call.1} parent=43 // pred_check_branch
          %325 = sbr.rel (%p323) target = $region48
        $region47: #{tpu_custom_call.1} parent=43 // pred_region
          %s326 = sand.u32 %s35, 1
          %s327 = scalar_lea.sflag [#allocation3], %s326
          %s328 = sand.u32 %s35, 1
          %s329 = smul.addr %s328, 16
          %s330 = scalar_lea.vmem [#allocation2], %s329
          %332 = vsyncadd %s327, 0
          %s333 = smul.addr %s25, 2
          %s334 = smul.addr %s333, 8
          %s335 = scalar_lea.hbm %s0, %s334
          %s336 = sshll.u32 %s335, 4
          %s337 = int_to_ptr.hbm [resolvable:$true] %s336
          %s338 = sshll.u32 %s330, 4
          %s339 = int_to_ptr.vmem [resolvable:$true] %s338
          %344 = dma.hbm_to_vmem [thread:$0]  %s337, 256, %s339, %s327, 128, 128, 8
        $region48: #{tpu_custom_call.1} parent=43 // pred_fallthru
          _
        // Predicated region
        $region49: #{tpu_custom_call.1} parent=43 // pred_check
          %p345 = pneg %p71
        $region50: #{tpu_custom_call.1} parent=43 // pred_check_branch
          %347 = sbr.rel (%p345) target = $region52
        $region51: #{tpu_custom_call.1} parent=43 // pred_region
          %s348 = sand.u32 %s25, 1
          %s349 = scalar_lea.sflag [#allocation6], %s348
          %s350 = sand.u32 %s61, 1
          %s351 = smul.addr %s350, 8
          %s352 = scalar_lea.vmem [#allocation5], %s351
          %354 = vsyncadd %s349, 0
          %s355 = smul.addr %s25, 8
          %s356 = scalar_lea.hbm %s1, %s355
          %s358 = sshll.u32 %s356, 4
          %s359 = int_to_ptr.hbm [resolvable:$true] %s358
          %s360 = sshll.u32 %s352, 4
          %s361 = int_to_ptr.vmem [resolvable:$true] %s360
          %363 = dma.hbm_to_vmem [thread:$0]  %s359, 128, %s361, %s349
        $region52: #{tpu_custom_call.1} parent=43 // pred_fallthru
          _
      $region44: #{tpu_custom_call.1} parent=5 // pred_fallthru
        _
      %p364 = scmp.le.s32.totalorder 1, %s25
      %p365 = scmp.lt.s32.totalorder %s25, 3
      %p366 = pnand %p364, %p365
      %p367 = pneg %p366
      // Predicated region
      $region53: #{tpu_custom_call.1} parent=5 // pred_check
        _
      $region54: #{tpu_custom_call.1} parent=5 // pred_check_branch
        %369 = sbr.rel (%p366) target = $region56
      $region55: #{tpu_custom_call.1} parent=5 // pred_region
        %s370 = ssub.s32 %s25, 1
        %s371 = sand.u32 %s38, 1
        %s372 = scalar_lea.sflag [#allocation3], %s371
        %s373 = sand.u32 %s38, 1
        %s374 = smul.addr %s373, 16
        %s375 = scalar_lea.vmem [#allocation2], %s374
        // Predicated region
        $region57: #{tpu_custom_call.1} parent=55 // pred_check
          %p376 = pneg %p51
        $region58: #{tpu_custom_call.1} parent=55 // pred_check_branch
          %378 = sbr.rel (%p376) target = $region60
        $region59: #{tpu_custom_call.1} parent=55 // pred_region
          %380 = dma.done %s372, 256
        $region60: #{tpu_custom_call.1} parent=55 // pred_fallthru
          _
        %s381 = sand.u32 %s30, 1
        %s382 = scalar_lea.sflag [#allocation6], %s381
        %s383 = sand.u32 %s64, 1
        %s384 = smul.addr %s383, 8
        %s385 = scalar_lea.vmem [#allocation5], %s384
        // Predicated region
        $region61: #{tpu_custom_call.1} parent=55 // pred_check
          %p386 = pneg %p77
        $region62: #{tpu_custom_call.1} parent=55 // pred_check_branch
          %388 = sbr.rel (%p386) target = $region64
        $region63: #{tpu_custom_call.1} parent=55 // pred_region
          %390 = dma.done %s382, 128
        $region64: #{tpu_custom_call.1} parent=55 // pred_fallthru
          _
        // Predicated region
        $region65: #{tpu_custom_call.1} parent=55 // pred_check
          %p391 = pneg %p98
        $region66: #{tpu_custom_call.1} parent=55 // pred_check_branch
          %393 = sbr.rel (%p391) target = $region68
        $region67: #{tpu_custom_call.1} parent=55 // pred_region
          %395 = dma.done [#allocation6], 1024
        $region68: #{tpu_custom_call.1} parent=55 // pred_fallthru
          _
        // Predicated region
        $region69: #{tpu_custom_call.1} parent=55 // pred_check
          %p396 = pneg %p119
        $region70: #{tpu_custom_call.1} parent=55 // pred_check_branch
          %398 = sbr.rel (%p396) target = $region72
        $region71: #{tpu_custom_call.1} parent=55 // pred_region
          %400 = dma.done [#allocation9], 2048
        $region72: #{tpu_custom_call.1} parent=55 // pred_fallthru
          _
        // Predicated region
        $region73: #{tpu_custom_call.1} parent=55 // pred_check
          %p401 = pneg %p182
        $region74: #{tpu_custom_call.1} parent=55 // pred_check_branch
          %403 = sbr.rel (%p401) target = $region76
        $region75: #{tpu_custom_call.1} parent=55 // pred_region
          %405 = dma.done [#allocation9], 2048
        $region76: #{tpu_custom_call.1} parent=55 // pred_fallthru
          _
        %s406 = sand.u32 %s38, 1
        %s407 = scalar_lea.sflag [#allocation3], %s406
        %s408 = sand.u32 %s38, 1
        %s409 = smul.addr %s408, 16
        %s410 = scalar_lea.vmem [#allocation2], %s409
        %p411 = pneg %p51
        %p412 = pneg %p48
        %s413 = sand.u32 %s30, 1
        %s414 = scalar_lea.sflag [#allocation6], %s413
        %s415 = sand.u32 %s64, 1
        %s416 = smul.addr %s415, 8
        %s417 = scalar_lea.vmem [#allocation5], %s416
        %p418 = pneg %p77
        %p419 = pneg %p74
        %p420 = pneg %p98
        %p421 = pneg %p95
        %p422 = pneg %p119
        %p423 = pneg %p116
        %p424 = pneg %p140
        %p425 = pneg %p137
        %p426 = pneg %p161
        %p427 = pneg %p158
        %p428 = pneg %p182
        %p429 = pneg %p179
        %p430 = pneg %p203
        %p431 = pneg %p200
        %p432 = pneg %p224
        %p433 = pneg %p221
        %p434 = pneg %p250
        %p435 = pneg %p247
        %s436 = sand.u32 %s237, 1
        %s437 = scalar_lea.sflag [#allocation4], %s436
        %s438 = sand.u32 %s237, 1
        %s439 = smul.addr %s438, 16
        %s440 = scalar_lea.vmem [#allocation11], %s439
        %v441 = vld [vmem:[%s375] sm:$0xff]
        %v442 = vld [vmem:[%s375 + $0x8] sm:$0xff]
        %v443 = vld [vmem:[%s385] sm:$0xff]
        %v444 = vld [vmem:[%s7] sm:$0x1]
        %vm445 = vcmask 523264
        %v446 = vsel %vm445, %v441, 0.0
        %447 = vadd.xlane.f32.xlu0 %v446
        %v448 = vpop.xlane.xlu0 %447
        %v449 = vsel %vm445, %v442, 0.0
        %450 = vadd.xlane.f32.xlu0 %v449
        %v451 = vpop.xlane.xlu0 %450
        %v452 = vrcp.pop 64.0
        %v453 = vmul.f32 64.0, %v452
        %v454 = vsub.f32 1.0, %v453
        %v455 = vmul.f32 %v452, %v454
        %v456 = vadd.f32 %v452, %v455
        %vm457 = vweird.f32 %v452
        %v458 = vsel %vm457, %v452, %v456
        %v459 = vmul.f32 %v448, %v458
        %v460 = vmul.f32 %v451, %v458
        %v461 = vsub.f32 %v441, %v459
        %v462 = vsub.f32 %v442, %v460
        %v463 = vmul.f32 %v461, %v461
        %v464 = vmul.f32 %v462, %v462
        %v465 = vsel %vm445, %v463, 0.0
        %466 = vadd.xlane.f32.xlu0 %v465
        %v467 = vpop.xlane.xlu0 %466
        %v468 = vsel %vm445, %v464, 0.0
        %469 = vadd.xlane.f32.xlu0 %v468
        %v470 = vpop.xlane.xlu0 %469
        %v471 = vmul.f32 %v467, %v458
        %v472 = vmul.f32 %v470, %v458
        %v473 = vadd.f32 %v471, 1e-05
        %v474 = vadd.f32 %v472, 1e-05
        %v475 = vrsqrt.pop %v473
        %v476 = vmul.f32 %v475, %v473
        %v477 = vmul.f32 %v476, %v475
        %v478 = vmul.f32 0.5, %v477
        %v479 = vsub.f32 1.5, %v478
        %v480 = vmul.f32 %v475, %v479
        %vm481 = vweird.f32 %v473
        %vm482 = vweird.f32 %v475
        %vm483 = vmor %vm481, %vm482
        %v484 = vsel %vm483, %v475, %v480
        %v485 = vrsqrt.pop %v474
        %v486 = vmul.f32 %v485, %v474
        %v487 = vmul.f32 %v486, %v485
        %v488 = vmul.f32 0.5, %v487
        %v489 = vsub.f32 1.5, %v488
        %v490 = vmul.f32 %v485, %v489
        %vm491 = vweird.f32 %v474
        %vm492 = vweird.f32 %v485
        %vm493 = vmor %vm491, %vm492
        %v494 = vsel %vm493, %v485, %v490
        %v495 = vmul.f32 %v461, %v484
        %v496 = vmul.f32 %v462, %v494
        %v498 = vperm.slane %v444, 0
        %v500 = vmul.f32 %v495, %v498
        %v501 = vmul.f32 %v496, %v498
        %v502 = vld [vmem:[#allocation7] sm:$0xff]
        %v503 = vld [vmem:[#allocation7 + $0x8] sm:$0xff]
        %v504 = vld [vmem:[#allocation7 + $0x10] sm:$0xff]
        %v505 = vld [vmem:[#allocation7 + $0x18] sm:$0xff]
        %v506 = vld [vmem:[#allocation7 + $0x20] sm:$0xff]
        %v507 = vld [vmem:[#allocation7 + $0x28] sm:$0xff]
        %v508 = vld [vmem:[#allocation7 + $0x30] sm:$0xff]
        %v509 = vld [vmem:[#allocation7 + $0x38] sm:$0xff]
        %v511 = vsel %vm445, %v500, 0
        %v514 = vsel %vm445, %v501, 0
        %516 = vmatpush.msra.mxu0 0.0
        %517 = vmatpush.msra.mxu0 0.0
        %518 = vmatpush.msra.mxu0 0.0
        %519 = vmatpush.msra.mxu0 0.0
        %520 = vmatpush.msra.mxu0 0.0
        %521 = vmatpush.msra.mxu0 0.0
        %522 = vmatpush.msra.mxu0 0.0
        %523 = vmatpush.msra.mxu0 0.0
        %524 = vmatpush.msra.mxu0 %v509
        %525 = vmatpush.msra.mxu0 %v508
        %526 = vmatpush.msra.mxu0 %v507
        %527 = vmatpush.msra.mxu0 %v506
        %528 = vmatpush.msra.mxu0 %v505
        %529 = vmatpush.msra.mxu0 %v504
        %530 = vmatpush.msra.mxu0 %v503
        %531 = vmatpush.msra.mxu0 %v502
        %532 = vmatmul.f32.gmra.mxu0 %v511
        %v533 = vpop.f32.mrf.mxu0
        %v534 = vadd.f32 0.0, %v533
        %535 = vmatmul.f32.gmra.mxu0 %v514
        %v536 = vpop.f32.mrf.mxu0
        %v537 = vadd.f32 0.0, %v536
        %538 = vdwg.mxu0
        %v539 = vmul.f32 %v534, 0.125
        %v540 = vmul.f32 %v537, 0.125
        %v541 = vld [vmem:[#allocation8] sm:$0xff]
        %v542 = vld [vmem:[#allocation8 + $0x8] sm:$0xff]
        %v543 = vld [vmem:[#allocation8 + $0x10] sm:$0xff]
        %v544 = vld [vmem:[#allocation8 + $0x18] sm:$0xff]
        %v545 = vld [vmem:[#allocation8 + $0x20] sm:$0xff]
        %v546 = vld [vmem:[#allocation8 + $0x28] sm:$0xff]
        %v547 = vld [vmem:[#allocation8 + $0x30] sm:$0xff]
        %v548 = vld [vmem:[#allocation8 + $0x38] sm:$0xff]
        %v549 = vld [vmem:[#allocation8 + $0x40] sm:$0xff]
        %v550 = vld [vmem:[#allocation8 + $0x48] sm:$0xff]
        %v551 = vld [vmem:[#allocation8 + $0x50] sm:$0xff]
        %v552 = vld [vmem:[#allocation8 + $0x58] sm:$0xff]
        %v553 = vld [vmem:[#allocation8 + $0x60] sm:$0xff]
        %v554 = vld [vmem:[#allocation8 + $0x68] sm:$0xff]
        %v555 = vld [vmem:[#allocation8 + $0x70] sm:$0xff]
        %v556 = vld [vmem:[#allocation8 + $0x78] sm:$0xff]
        %v558 = vsel %vm445, %v443, 0
        %560 = vmatpush.msra.mxu0 0.0
        %561 = vmatpush.msra.mxu0 0.0
        %562 = vmatpush.msra.mxu0 0.0
        %563 = vmatpush.msra.mxu0 0.0
        %564 = vmatpush.msra.mxu0 0.0
        %565 = vmatpush.msra.mxu0 0.0
        %566 = vmatpush.msra.mxu0 0.0
        %567 = vmatpush.msra.mxu0 0.0
        %568 = vmatpush.msra.mxu0 %v555
        %569 = vmatpush.msra.mxu0 %v553
        %570 = vmatpush.msra.mxu0 %v551
        %571 = vmatpush.msra.mxu0 %v549
        %572 = vmatpush.msra.mxu0 %v547
        %573 = vmatpush.msra.mxu0 %v545
        %574 = vmatpush.msra.mxu0 %v543
        %575 = vmatpush.msra.mxu0 %v541
        %576 = vmatmul.f32.gmra.mxu0 %v558
        %v577 = vpop.f32.mrf.mxu0
        %v578 = vadd.f32 0.0, %v577
        %579 = vdwg.mxu0
        %580 = vmatpush.msra.mxu0 0.0
        %581 = vmatpush.msra.mxu0 0.0
        %582 = vmatpush.msra.mxu0 0.0
        %583 = vmatpush.msra.mxu0 0.0
        %584 = vmatpush.msra.mxu0 0.0
        %585 = vmatpush.msra.mxu0 0.0
        %586 = vmatpush.msra.mxu0 0.0
        %587 = vmatpush.msra.mxu0 0.0
        %588 = vmatpush.msra.mxu0 %v556
        %589 = vmatpush.msra.mxu0 %v554
        %590 = vmatpush.msra.mxu0 %v552
        %591 = vmatpush.msra.mxu0 %v550
        %592 = vmatpush.msra.mxu0 %v548
        %593 = vmatpush.msra.mxu0 %v546
        %594 = vmatpush.msra.mxu0 %v544
        %595 = vmatpush.msra.mxu0 %v542
        %596 = vmatmul.f32.gmra.mxu0 %v558
        %v597 = vpop.f32.mrf.mxu0
        %v598 = vadd.f32 0.0, %v597
        %599 = vdwg.mxu0
        %v600 = vld [vmem:[%s4] sm:$0x1]
        %v601 = vld [vmem:[%s5] sm:$0x1]
        %604 = vrot.lane.b32.xlu0 %v539, 64
        %v605 = vpop.permute.xlu0 %604
        %606 = vrot.lane.b32.xlu0 %v540, 64
        %v607 = vpop.permute.xlu0 %606
        %610 = vrot.lane.b32.xlu0 %v578, 64
        %v611 = vpop.permute.xlu0 %610
        %612 = vrot.lane.b32.xlu0 %v600, 64
        %v613 = vpop.permute.xlu0 %612
        %616 = vrot.lane.b32.xlu0 %v598, 64
        %v617 = vpop.permute.xlu0 %616
        %618 = vrot.lane.b32.xlu0 %v601, 64
        %v619 = vpop.permute.xlu0 %618
        %v621 = vsel %vm445, %v539, 0
        %v623 = vsel %vm445, %v540, 0
        %v625 = vsel %vm445, %v578, 0
        %v627 = vsel %vm445, %v600, 0
        %629 = vmatpush.xpose.msra.mxu0 0.0
        %630 = vmatpush.xpose.msra.mxu0 0.0
        %631 = vmatpush.xpose.msra.mxu0 0.0
        %632 = vmatpush.xpose.msra.mxu0 0.0
        %633 = vmatpush.xpose.msra.mxu0 0.0
        %634 = vmatpush.xpose.msra.mxu0 0.0
        %635 = vmatpush.xpose.msra.mxu0 0.0
        %636 = vmatpush.xpose.msra.mxu0 0.0
        %637 = vmatpush.xpose.msra.mxu0 0.0
        %638 = vmatpush.xpose.msra.mxu0 0.0
        %639 = vmatpush.xpose.msra.mxu0 0.0
        %640 = vmatpush.xpose.msra.mxu0 0.0
        %641 = vmatpush.xpose.msra.mxu0 0.0
        %642 = vmatpush.xpose.msra.mxu0 0.0
        %643 = vmatpush.xpose.msra.mxu0 %v627
        %644 = vmatpush.xpose.msra.mxu0 %v625
        %645 = vmatmul.f32.gmra.mxu0 %v621
        %v646 = vpop.f32.mrf.mxu0
        %v647 = vadd.f32 0.0, %v646
        %648 = vmatmul.f32.gmra.mxu0 %v623
        %v649 = vpop.f32.mrf.mxu0
        %v650 = vadd.f32 0.0, %v649
        %651 = vdwg.mxu0
        %v652 = vsel %vm445, %v605, 0
        %v654 = vsel %vm445, %v607, 0
        %v656 = vsel %vm445, %v611, 0
        %v658 = vsel %vm445, %v613, 0
        %660 = vmatpush.xpose.msra.mxu0 0.0
        %661 = vmatpush.xpose.msra.mxu0 0.0
        %662 = vmatpush.xpose.msra.mxu0 0.0
        %663 = vmatpush.xpose.msra.mxu0 0.0
        %664 = vmatpush.xpose.msra.mxu0 0.0
        %665 = vmatpush.xpose.msra.mxu0 0.0
        %666 = vmatpush.xpose.msra.mxu0 0.0
        %667 = vmatpush.xpose.msra.mxu0 0.0
        %668 = vmatpush.xpose.msra.mxu0 0.0
        %669 = vmatpush.xpose.msra.mxu0 0.0
        %670 = vmatpush.xpose.msra.mxu0 0.0
        %671 = vmatpush.xpose.msra.mxu0 0.0
        %672 = vmatpush.xpose.msra.mxu0 0.0
        %673 = vmatpush.xpose.msra.mxu0 0.0
        %674 = vmatpush.xpose.msra.mxu0 %v658
        %675 = vmatpush.xpose.msra.mxu0 %v656
        %676 = vmatmul.f32.gmra.mxu0 %v652
        %v677 = vpop.f32.mrf.mxu0
        %v678 = vadd.f32 0.0, %v677
        %679 = vmatmul.f32.gmra.mxu0 %v654
        %v680 = vpop.f32.mrf.mxu0
        %v681 = vadd.f32 0.0, %v680
        %682 = vdwg.mxu0
        %vm683 = vcmask 72704
        %v684 = vsel %vm683, %v647, -inf
        %685 = vmax.xlane.f32.xlu0 %v684
        %v686 = vpop.xlane.xlu0 %685
        %v687 = vsel %vm683, %v650, -inf
        %688 = vmax.xlane.f32.xlu0 %v687
        %v689 = vpop.xlane.xlu0 %688
        %v690 = vsel %vm683, %v678, -inf
        %691 = vmax.xlane.f32.xlu0 %v690
        %v692 = vpop.xlane.xlu0 %691
        %v693 = vsel %vm683, %v681, -inf
        %694 = vmax.xlane.f32.xlu0 %v693
        %v695 = vpop.xlane.xlu0 %694
        %v696 = vsub.f32 %v647, %v686
        %v697 = vsub.f32 %v650, %v689
        %v698 = vsub.f32 %v678, %v692
        %v699 = vsub.f32 %v681, %v695
        %v700 = vmul.f32 %v696, 1.442695
        %v701 = vpow.pop %v700
        %v702 = vmul.f32 %v697, 1.442695
        %v703 = vpow.pop %v702
        %v704 = vmul.f32 %v698, 1.442695
        %v705 = vpow.pop %v704
        %v706 = vmul.f32 %v699, 1.442695
        %v707 = vpow.pop %v706
        %v708 = vsel %vm683, %v701, 0.0
        %709 = vadd.xlane.f32.xlu0 %v708
        %v710 = vpop.xlane.xlu0 %709
        %v711 = vsel %vm683, %v703, 0.0
        %712 = vadd.xlane.f32.xlu0 %v711
        %v713 = vpop.xlane.xlu0 %712
        %v714 = vsel %vm683, %v705, 0.0
        %715 = vadd.xlane.f32.xlu0 %v714
        %v716 = vpop.xlane.xlu0 %715
        %v717 = vsel %vm683, %v707, 0.0
        %718 = vadd.xlane.f32.xlu0 %v717
        %v719 = vpop.xlane.xlu0 %718
        %v720 = vrcp.pop %v710
        %v721 = vrcp.pop %v713
        %v722 = vrcp.pop %v716
        %v723 = vrcp.pop %v719
        %v724 = vmul.f32 %v710, %v720
        %v725 = vmul.f32 %v713, %v721
        %v726 = vmul.f32 %v716, %v722
        %v727 = vmul.f32 %v719, %v723
        %v728 = vsub.f32 2.0, %v724
        %v729 = vsub.f32 2.0, %v725
        %v730 = vsub.f32 2.0, %v726
        %v731 = vsub.f32 2.0, %v727
        %v732 = vmul.f32 %v720, %v728
        %v733 = vmul.f32 %v721, %v729
        %v734 = vmul.f32 %v722, %v730
        %v735 = vmul.f32 %v723, %v731
        %v736 = vmul.f32 %v701, %v732
        %v737 = vmul.f32 %v703, %v733
        %v738 = vmul.f32 %v705, %v734
        %v739 = vmul.f32 %v707, %v735
        %v741 = vsel %vm683, %v736, 0
        %v744 = vsel %vm683, %v737, 0
        %vm746 = vcmask 1040384
        %v747 = vsel %vm746, %v601, 0
        %749 = vmatpush.msra.mxu0 0.0
        %750 = vmatpush.msra.mxu0 0.0
        %751 = vmatpush.msra.mxu0 0.0
        %752 = vmatpush.msra.mxu0 0.0
        %753 = vmatpush.msra.mxu0 0.0
        %754 = vmatpush.msra.mxu0 0.0
        %755 = vmatpush.msra.mxu0 0.0
        %756 = vmatpush.msra.mxu0 0.0
        %757 = vmatpush.msra.mxu0 0.0
        %758 = vmatpush.msra.mxu0 0.0
        %759 = vmatpush.msra.mxu0 0.0
        %760 = vmatpush.msra.mxu0 0.0
        %761 = vmatpush.msra.mxu0 0.0
        %762 = vmatpush.msra.mxu0 0.0
        %763 = vmatpush.msra.mxu0 %v747
        %764 = vmatpush.msra.mxu0 %v598
        %765 = vmatmul.f32.gmra.mxu0 %v741
        %v766 = vpop.f32.mrf.mxu0
        %v767 = vadd.f32 0.0, %v766
        %768 = vmatmul.f32.gmra.mxu0 %v744
        %v769 = vpop.f32.mrf.mxu0
        %v770 = vadd.f32 0.0, %v769
        %771 = vdwg.mxu0
        %v773 = vsel %vm683, %v738, 0
        %v776 = vsel %vm683, %v739, 0
        %v778 = vsel %vm746, %v619, 0
        %780 = vmatpush.msra.mxu0 0.0
        %781 = vmatpush.msra.mxu0 0.0
        %782 = vmatpush.msra.mxu0 0.0
        %783 = vmatpush.msra.mxu0 0.0
        %784 = vmatpush.msra.mxu0 0.0
        %785 = vmatpush.msra.mxu0 0.0
        %786 = vmatpush.msra.mxu0 0.0
        %787 = vmatpush.msra.mxu0 0.0
        %788 = vmatpush.msra.mxu0 0.0
        %789 = vmatpush.msra.mxu0 0.0
        %790 = vmatpush.msra.mxu0 0.0
        %791 = vmatpush.msra.mxu0 0.0
        %792 = vmatpush.msra.mxu0 0.0
        %793 = vmatpush.msra.mxu0 0.0
        %794 = vmatpush.msra.mxu0 %v778
        %795 = vmatpush.msra.mxu0 %v617
        %796 = vmatmul.f32.gmra.mxu0 %v773
        %v797 = vpop.f32.mrf.mxu0
        %v798 = vadd.f32 0.0, %v797
        %799 = vmatmul.f32.gmra.mxu0 %v776
        %v800 = vpop.f32.mrf.mxu0
        %v801 = vadd.f32 0.0, %v800
        %802 = vdwg.mxu0
        %v803 = vld [vmem:[#allocation10] sm:$0xff]
        %v804 = vld [vmem:[#allocation10 + $0x8] sm:$0xff]
        %v805 = vld [vmem:[#allocation10 + $0x10] sm:$0xff]
        %v806 = vld [vmem:[#allocation10 + $0x18] sm:$0xff]
        %v807 = vld [vmem:[#allocation10 + $0x20] sm:$0xff]
        %v808 = vld [vmem:[#allocation10 + $0x28] sm:$0xff]
        %v809 = vld [vmem:[#allocation10 + $0x30] sm:$0xff]
        %v810 = vld [vmem:[#allocation10 + $0x38] sm:$0xff]
        %v811 = vld [vmem:[#allocation10 + $0x40] sm:$0xff]
        %v812 = vld [vmem:[#allocation10 + $0x48] sm:$0xff]
        %v813 = vld [vmem:[#allocation10 + $0x50] sm:$0xff]
        %v814 = vld [vmem:[#allocation10 + $0x58] sm:$0xff]
        %v815 = vld [vmem:[#allocation10 + $0x60] sm:$0xff]
        %v816 = vld [vmem:[#allocation10 + $0x68] sm:$0xff]
        %v817 = vld [vmem:[#allocation10 + $0x70] sm:$0xff]
        %v818 = vld [vmem:[#allocation10 + $0x78] sm:$0xff]
        %v820 = vsel %vm445, %v767, 0
        %v823 = vsel %vm445, %v770, 0
        %825 = vmatpush.msra.mxu0 0.0
        %826 = vmatpush.msra.mxu0 0.0
        %827 = vmatpush.msra.mxu0 0.0
        %828 = vmatpush.msra.mxu0 0.0
        %829 = vmatpush.msra.mxu0 0.0
        %830 = vmatpush.msra.mxu0 0.0
        %831 = vmatpush.msra.mxu0 0.0
        %832 = vmatpush.msra.mxu0 0.0
        %833 = vmatpush.msra.mxu0 %v810
        %834 = vmatpush.msra.mxu0 %v809
        %835 = vmatpush.msra.mxu0 %v808
        %836 = vmatpush.msra.mxu0 %v807
        %837 = vmatpush.msra.mxu0 %v806
        %838 = vmatpush.msra.mxu0 %v805
        %839 = vmatpush.msra.mxu0 %v804
        %840 = vmatpush.msra.mxu0 %v803
        %841 = vmatmul.f32.gmra.mxu0 %v820
        %v842 = vpop.f32.mrf.mxu0
        %v843 = vadd.f32 0.0, %v842
        %844 = vmatmul.f32.gmra.mxu0 %v823
        %v845 = vpop.f32.mrf.mxu0
        %v846 = vadd.f32 0.0, %v845
        %847 = vdwg.mxu0
        %v849 = vsel %vm445, %v798, 0
        %v852 = vsel %vm445, %v801, 0
        %854 = vmatpush.msra.mxu0 0.0
        %855 = vmatpush.msra.mxu0 0.0
        %856 = vmatpush.msra.mxu0 0.0
        %857 = vmatpush.msra.mxu0 0.0
        %858 = vmatpush.msra.mxu0 0.0
        %859 = vmatpush.msra.mxu0 0.0
        %860 = vmatpush.msra.mxu0 0.0
        %861 = vmatpush.msra.mxu0 0.0
        %862 = vmatpush.msra.mxu0 %v818
        %863 = vmatpush.msra.mxu0 %v817
        %864 = vmatpush.msra.mxu0 %v816
        %865 = vmatpush.msra.mxu0 %v815
        %866 = vmatpush.msra.mxu0 %v814
        %867 = vmatpush.msra.mxu0 %v813
        %868 = vmatpush.msra.mxu0 %v812
        %869 = vmatpush.msra.mxu0 %v811
        %870 = vmatmul.f32.gmra.mxu0 %v849
        %v871 = vpop.f32.mrf.mxu0
        %v872 = vadd.f32 0.0, %v871
        %873 = vmatmul.f32.gmra.mxu0 %v852
        %v874 = vpop.f32.mrf.mxu0
        %v875 = vadd.f32 0.0, %v874
        %876 = vdwg.mxu0
        %v877 = vadd.f32 %v843, %v872
        %v878 = vadd.f32 %v846, %v875
        %v879 = vld [vmem:[%s8] sm:$0x1]
        %v880 = vsel %vm445, %v877, 0.0
        %881 = vadd.xlane.f32.xlu0 %v880
        %v882 = vpop.xlane.xlu0 %881
        %v883 = vsel %vm445, %v878, 0.0
        %884 = vadd.xlane.f32.xlu0 %v883
        %v885 = vpop.xlane.xlu0 %884
        %v886 = vmul.f32 %v882, %v458
        %v887 = vmul.f32 %v885, %v458
        %v888 = vsub.f32 %v877, %v886
        %v889 = vsub.f32 %v878, %v887
        %v890 = vmul.f32 %v888, %v888
        %v891 = vmul.f32 %v889, %v889
        %v892 = vsel %vm445, %v890, 0.0
        %893 = vadd.xlane.f32.xlu0 %v892
        %v894 = vpop.xlane.xlu0 %893
        %v895 = vsel %vm445, %v891, 0.0
        %896 = vadd.xlane.f32.xlu0 %v895
        %v897 = vpop.xlane.xlu0 %896
        %v898 = vmul.f32 %v894, %v458
        %v899 = vmul.f32 %v897, %v458
        %v900 = vadd.f32 %v898, 1e-05
        %v901 = vadd.f32 %v899, 1e-05
        %v902 = vrsqrt.pop %v900
        %v903 = vmul.f32 %v902, %v900
        %v904 = vmul.f32 %v903, %v902
        %v905 = vmul.f32 0.5, %v904
        %v906 = vsub.f32 1.5, %v905
        %v907 = vmul.f32 %v902, %v906
        %vm908 = vweird.f32 %v900
        %vm909 = vweird.f32 %v902
        %vm910 = vmor %vm908, %vm909
        %v911 = vsel %vm910, %v902, %v907
        %v912 = vrsqrt.pop %v901
        %v913 = vmul.f32 %v912, %v901
        %v914 = vmul.f32 %v913, %v912
        %v915 = vmul.f32 0.5, %v914
        %v916 = vsub.f32 1.5, %v915
        %v917 = vmul.f32 %v912, %v916
        %vm918 = vweird.f32 %v901
        %vm919 = vweird.f32 %v912
        %vm920 = vmor %vm918, %vm919
        %v921 = vsel %vm920, %v912, %v917
        %v922 = vmul.f32 %v888, %v911
        %v923 = vmul.f32 %v889, %v921
        %v925 = vperm.slane %v879, 0
        %v927 = vmul.f32 %v922, %v925
        %v928 = vmul.f32 %v923, %v925
        %929 = vst.msk [vmem:[%s440] sm:$0xff] %vm445, %v927
        %930 = vst.msk [vmem:[%s440 + $0x8] sm:$0xff] %vm445, %v928
        %s931 = sand.u32 %s237, 1
        %s932 = scalar_lea.sflag [#allocation4], %s931
        %s933 = sand.u32 %s237, 1
        %s934 = smul.addr %s933, 16
        %s935 = scalar_lea.vmem [#allocation11], %s934
        // Predicated region
        $region77: #{tpu_custom_call.1} parent=55 // pred_check
          %p936 = pneg %p247
        $region78: #{tpu_custom_call.1} parent=55 // pred_check_branch
          %938 = sbr.rel (%p936) target = $region80
        $region79: #{tpu_custom_call.1} parent=55 // pred_region
          %940 = vsyncadd %s932, 0
          %s941 = smul.addr %s30, 2
          %s942 = smul.addr %s941, 8
          %s943 = scalar_lea.hbm %s9, %s942
          %s944 = sshll.u32 %s935, 4
          %s945 = int_to_ptr.vmem [resolvable:$true] %s944
          %s946 = sshll.u32 %s943, 4
          %s947 = int_to_ptr.hbm [resolvable:$true] %s946
          %952 = dma.vmem_to_hbm [thread:$0]  %s945, 256, %s947, %s932, 128, 128, 8
        $region80: #{tpu_custom_call.1} parent=55 // pred_fallthru
          _
      $region56: #{tpu_custom_call.1} parent=5 // pred_fallthru
        _
      %p953 = scmp.le.s32.totalorder 2, %s25
      // Predicated region
      $region81: #{tpu_custom_call.1} parent=5 // pred_check
        %p954 = pneg %p953
      $region82: #{tpu_custom_call.1} parent=5 // pred_check_branch
        %956 = sbr.rel (%p954) target = $region84
      $region83: #{tpu_custom_call.1} parent=5 // pred_region
        %s957 = ssub.s32 %s25, 2
        // Predicated region
        $region85: #{tpu_custom_call.1} parent=83 // pred_check
          %p958 = pneg %p253
        $region86: #{tpu_custom_call.1} parent=83 // pred_check_branch
          %960 = sbr.rel (%p958) target = $region88
        $region87: #{tpu_custom_call.1} parent=83 // pred_region
          %s961 = sand.u32 %s238, 1
          %s962 = scalar_lea.sflag [#allocation4], %s961
          %s963 = sand.u32 %s238, 1
          %s964 = smul.addr %s963, 16
          %s965 = scalar_lea.vmem [#allocation11], %s964
          %967 = dma.done %s962, 256
        $region88: #{tpu_custom_call.1} parent=83 // pred_fallthru
          _
      $region84: #{tpu_custom_call.1} parent=5 // pred_fallthru
        _
    $region6: #{tpu_custom_call.1} parent=1 // loop_footer
      %s29 = sadd.s32 1, %s25
    $region7: #{tpu_custom_call.1} parent=1 // loop_footer_branch
      %24 = sbr.rel target = $region3
    $region8: #{tpu_custom_call.1} parent=1 // loop_exit
      _
    %968 = vsyncpa [#allocation3], 1
    %s969 = scalar_lea.sflag [#allocation3], 1
    %970 = vsyncpa %s969, 1
    %971 = vsyncpa [#allocation6], 1
    %s972 = scalar_lea.sflag [#allocation6], 1
    %973 = vsyncpa %s972, 1
    %974 = vsyncpa [#allocation9], 1
    %975 = vsyncpa [#allocation4], 1
    %s976 = scalar_lea.sflag [#allocation4], 1
    %977 = vsyncpa %s976, 1

</llo_original>
